<compile_context>
chip_gen: v7x
topology: tpu7x:2x2x1
jax: 0.10.0
libtpu: 0.0.40
codegen_flags: <defaults>
</compile_context>

<pallas_src>
import jax
import jax.numpy as jnp
from jax.experimental import pallas as pl
from jax.experimental.pallas import tpu as pltpu


def _grad_loss_kernel(p_ref, l_ref, o_ref):
    # p_ref / l_ref: (TB, H, W) tiles in the caller's native dtype.
    # o_ref: (1, 1) SMEM partial-sum slot owned by this grid step.
    d = p_ref[...].astype(jnp.float32) - l_ref[...].astype(jnp.float32)
    _, hp, wp = d.shape

    # Cheap edge masks (column / row vectors), broadcast against the 3-D tile.
    ri = jax.lax.broadcasted_iota(jnp.int32, (hp, 1), 0)
    ci = jax.lax.broadcasted_iota(jnp.int32, (1, wp), 1)

    def up(x):       # out[i, j] = x[i-1, j], zero at i == 0
        return jnp.where(ri > 0, jnp.roll(x, 1, axis=1), 0.0)

    def down(x):     # out[i, j] = x[i+1, j], zero at i == hp-1
        return jnp.where(ri < hp - 1, jnp.roll(x, -1, axis=1), 0.0)

    def left(x):     # out[i, j] = x[i, j-1], zero at j == 0
        return jnp.where(ci > 0, jnp.roll(x, 1, axis=2), 0.0)

    def right(x):    # out[i, j] = x[i, j+1], zero at j == wp-1
        return jnp.where(ci < wp - 1, jnp.roll(x, -1, axis=2), 0.0)

    # Separable Sobel responses of the difference image.
    h = right(d) - left(d)                 # d[i, j+1] - d[i, j-1]
    gx = up(h) + 2.0 * h + down(h)
    v = down(d) - up(d)                    # d[i+1, j] - d[i-1, j]
    gy = left(v) + 2.0 * v + right(v)

    o_ref[0, 0] = jnp.sum(jnp.abs(gx) + jnp.abs(gy))


def gradient_loss(preds, labels, *, target_tile_bytes=1 << 20):
    """preds, labels: (B, 1, H, W). Returns the scalar Sobel-gradient L1 loss."""
    if preds.shape != labels.shape:
        raise ValueError("preds and labels must have identical shapes")
    B, C, H, W = preds.shape
    if C != 1:
        raise ValueError("GradientLoss uses a 1x1x3x3 kernel -> C must be 1")

    # Keep the native dtype across HBM; the f32 cast happens on the VMEM tile.
    p = preds.reshape(B, H, W)
    l = labels.reshape(B, H, W)

    itemsize = jnp.dtype(p.dtype).itemsize
    per_image = max(H * W * itemsize, 1)
    # Batch several images per grid step (~1 MiB per input tile) to amortise the
    # ~0.35 us per-step overhead while leaving VMEM headroom for f32 temporaries
    # and double-buffered inputs on all of v5e / v6e / v7x.
    tb = int(max(1, min(B, target_tile_bytes // per_image)))
    num_steps = pl.cdiv(B, tb)
    b_pad = num_steps * tb
    if b_pad != B:
        # Zero-padded images give d == 0, hence contribute nothing to the sum.
        pad = ((0, b_pad - B), (0, 0), (0, 0))
        p = jnp.pad(p, pad)
        l = jnp.pad(l, pad)

    # TODO(synk): for very large single images (per-image tile >> a few MiB, e.g.
    # 2048x2048 f32 on v7x's 64 MiB VMEM) tile H into row chunks with a 1-row halo
    # via manual DMA instead of a whole-image block.

    partial_sums = pl.pallas_call(
        _grad_loss_kernel,
        out_shape=jax.ShapeDtypeStruct((num_steps, 1), jnp.float32),
        grid=(num_steps,),
        in_specs=[
            pl.BlockSpec((tb, H, W), lambda s: (s, 0, 0)),
            pl.BlockSpec((tb, H, W), lambda s: (s, 0, 0)),
        ],
        out_specs=pl.BlockSpec(
            (1, 1), lambda s: (s, 0), memory_space=pltpu.MemorySpace.SMEM
        ),
        compiler_params=pltpu.CompilerParams(
            # No carried state between steps -> parallel grid (megacore-friendly).
            dimension_semantics=("parallel",)
        ),
    )(p, l)

    return jnp.sum(partial_sums) / jnp.float32(B * C * H * W)


# ---------------- plain-JAX reference (self-check only) ----------------
def _sobel_ref(x):  # x: (B, H, W) f32
    xp = jnp.pad(x, ((0, 0), (1, 1), (1, 1)))
    gx = (xp[:, :-2, 2:] - xp[:, :-2, :-2]
          + 2.0 * (xp[:, 1:-1, 2:] - xp[:, 1:-1, :-2])
          + xp[:, 2:, 2:] - xp[:, 2:, :-2])
    gy = (xp[:, 2:, :-2] - xp[:, :-2, :-2]
          + 2.0 * (xp[:, 2:, 1:-1] - xp[:, :-2, 1:-1])
          + xp[:, 2:, 2:] - xp[:, :-2, 2:])
    return gx, gy


def _gradient_loss_ref(preds, labels):
    B, C, H, W = preds.shape
    p = preds.reshape(B, H, W).astype(jnp.float32)
    l = labels.reshape(B, H, W).astype(jnp.float32)
    gxp, gyp = _sobel_ref(p)
    gxl, gyl = _sobel_ref(l)
    return jnp.mean(jnp.abs(gxp - gxl) + jnp.abs(gyp - gyl))


if __name__ == "__main__":
    key = jax.random.PRNGKey(0)
    k1, k2, k3, k4 = jax.random.split(key, 4)

    # Case 1: f32, non-128-multiple width, whole batch fits one tile (grid = 1).
    preds = jax.random.normal(k1, (2, 1, 24, 40), dtype=jnp.float32)
    labels = jax.random.normal(k2, (2, 1, 24, 40), dtype=jnp.float32)
    loss = jax.block_until_ready(gradient_loss(preds, labels))
    ref = _gradient_loss_ref(preds, labels)
    assert jnp.allclose(loss, ref, rtol=1e-4, atol=1e-5), (loss, ref)

    # Case 2: bf16 inputs, tiny tile target -> multi-step grid + batch padding path.
    preds2 = jax.random.normal(k3, (5, 1, 16, 16), dtype=jnp.bfloat16)
    labels2 = jax.random.normal(k4, (5, 1, 16, 16), dtype=jnp.bfloat16)
    loss2 = jax.block_until_ready(
        gradient_loss(preds2, labels2, target_tile_bytes=1024))
    ref2 = _gradient_loss_ref(preds2, labels2)
    assert jnp.allclose(loss2, ref2, rtol=1e-4, atol=1e-5), (loss2, ref2)

    print("KERNEL_OK")
</pallas_src>

<mosaic_0001>
module attributes {stable_mosaic.version = 11 : i64} {
  func.func @_grad_loss_kernel(%arg0: i32, %arg1: memref<2x24x40xf32, #tpu.memory_space<vmem>>, %arg2: memref<2x24x40xf32, #tpu.memory_space<vmem>>, %arg3: memref<1x1xf32, #tpu.memory_space<smem>>) attributes {dimension_semantics = [#tpu.dimension_semantics<parallel>], iteration_bounds = array<i64: 1>, scalar_prefetch = 0 : i64, scratch_operands = 0 : i64, tpu.core_type = #tpu.core_type<tc>, window_params = [{transform_indices = @transform_0, window_bounds = array<i64: 2, 24, 40>}, {transform_indices = @transform_1, window_bounds = array<i64: 2, 24, 40>}, {transform_indices = @transform_2, window_bounds = array<i64: 1, 1>}]} {
    %c0 = arith.constant 0 : index
    %c0_0 = arith.constant 0 : index
    %c0_1 = arith.constant 0 : index
    %0 = vector.load %arg1[%c0, %c0_0, %c0_1] : memref<2x24x40xf32, #tpu.memory_space<vmem>>, vector<2x24x40xf32>
    %c0_2 = arith.constant 0 : index
    %c0_3 = arith.constant 0 : index
    %c0_4 = arith.constant 0 : index
    %1 = vector.load %arg2[%c0_2, %c0_3, %c0_4] : memref<2x24x40xf32, #tpu.memory_space<vmem>>, vector<2x24x40xf32>
    %2 = arith.subf %0, %1 : vector<2x24x40xf32>
    %3 = tpu.iota {dimensions = array<i32: 0>} : vector<24x1xi32>
    %4 = tpu.iota {dimensions = array<i32: 1>} : vector<1x40xi32>
    %c39_i32 = arith.constant 39 : i32
    %5 = vector.broadcast %c39_i32 : i32 to vector<1x40xi32>
    %6 = arith.cmpi slt, %4, %5 : vector<1x40xi32>
    %7 = vector.extract_strided_slice %2 {offsets = [0, 0, 1], sizes = [2, 24, 39], strides = [1, 1, 1]} : vector<2x24x40xf32> to vector<2x24x39xf32>
    %8 = vector.extract_strided_slice %2 {offsets = [0, 0, 0], sizes = [2, 24, 1], strides = [1, 1, 1]} : vector<2x24x40xf32> to vector<2x24x1xf32>
    %9 = tpu.concatenate %7, %8 in 2 : vector<2x24x39xf32>, vector<2x24x1xf32> -> vector<2x24x40xf32>
    %cst = arith.constant 0.000000e+00 : f32
    %10 = vector.shape_cast %6 : vector<1x40xi1> to vector<1x1x40xi1>
    %11 = vector.broadcast %10 : vector<1x1x40xi1> to vector<2x24x40xi1>
    %12 = vector.broadcast %cst : f32 to vector<2x24x40xf32>
    %13 = arith.select %11, %9, %12 : vector<2x24x40xi1>, vector<2x24x40xf32>
    %c0_i32 = arith.constant 0 : i32
    %14 = vector.broadcast %c0_i32 : i32 to vector<1x40xi32>
    %15 = arith.cmpi sgt, %4, %14 : vector<1x40xi32>
    %16 = vector.extract_strided_slice %2 {offsets = [0, 0, 39], sizes = [2, 24, 1], strides = [1, 1, 1]} : vector<2x24x40xf32> to vector<2x24x1xf32>
    %17 = vector.extract_strided_slice %2 {offsets = [0, 0, 0], sizes = [2, 24, 39], strides = [1, 1, 1]} : vector<2x24x40xf32> to vector<2x24x39xf32>
    %18 = tpu.concatenate %16, %17 in 2 : vector<2x24x1xf32>, vector<2x24x39xf32> -> vector<2x24x40xf32>
    %cst_5 = arith.constant 0.000000e+00 : f32
    %19 = vector.shape_cast %15 : vector<1x40xi1> to vector<1x1x40xi1>
    %20 = vector.broadcast %19 : vector<1x1x40xi1> to vector<2x24x40xi1>
    %21 = vector.broadcast %cst_5 : f32 to vector<2x24x40xf32>
    %22 = arith.select %20, %18, %21 : vector<2x24x40xi1>, vector<2x24x40xf32>
    %23 = arith.subf %13, %22 : vector<2x24x40xf32>
    %c0_i32_6 = arith.constant 0 : i32
    %24 = vector.broadcast %c0_i32_6 : i32 to vector<24x1xi32>
    %25 = arith.cmpi sgt, %3, %24 : vector<24x1xi32>
    %26 = vector.extract_strided_slice %23 {offsets = [0, 23, 0], sizes = [2, 1, 40], strides = [1, 1, 1]} : vector<2x24x40xf32> to vector<2x1x40xf32>
    %27 = vector.extract_strided_slice %23 {offsets = [0, 0, 0], sizes = [2, 23, 40], strides = [1, 1, 1]} : vector<2x24x40xf32> to vector<2x23x40xf32>
    %28 = tpu.concatenate %26, %27 in 1 : vector<2x1x40xf32>, vector<2x23x40xf32> -> vector<2x24x40xf32>
    %cst_7 = arith.constant 0.000000e+00 : f32
    %29 = vector.shape_cast %25 : vector<24x1xi1> to vector<1x24x1xi1>
    %30 = vector.broadcast %29 : vector<1x24x1xi1> to vector<2x24x40xi1>
    %31 = vector.broadcast %cst_7 : f32 to vector<2x24x40xf32>
    %32 = arith.select %30, %28, %31 : vector<2x24x40xi1>, vector<2x24x40xf32>
    %cst_8 = arith.constant 2.000000e+00 : f32
    %33 = vector.broadcast %cst_8 : f32 to vector<2x24x40xf32>
    %34 = arith.mulf %33, %23 : vector<2x24x40xf32>
    %35 = arith.addf %32, %34 : vector<2x24x40xf32>
    %c23_i32 = arith.constant 23 : i32
    %36 = vector.broadcast %c23_i32 : i32 to vector<24x1xi32>
    %37 = arith.cmpi slt, %3, %36 : vector<24x1xi32>
    %38 = vector.extract_strided_slice %23 {offsets = [0, 1, 0], sizes = [2, 23, 40], strides = [1, 1, 1]} : vector<2x24x40xf32> to vector<2x23x40xf32>
    %39 = vector.extract_strided_slice %23 {offsets = [0, 0, 0], sizes = [2, 1, 40], strides = [1, 1, 1]} : vector<2x24x40xf32> to vector<2x1x40xf32>
    %40 = tpu.concatenate %38, %39 in 1 : vector<2x23x40xf32>, vector<2x1x40xf32> -> vector<2x24x40xf32>
    %cst_9 = arith.constant 0.000000e+00 : f32
    %41 = vector.shape_cast %37 : vector<24x1xi1> to vector<1x24x1xi1>
    %42 = vector.broadcast %41 : vector<1x24x1xi1> to vector<2x24x40xi1>
    %43 = vector.broadcast %cst_9 : f32 to vector<2x24x40xf32>
    %44 = arith.select %42, %40, %43 : vector<2x24x40xi1>, vector<2x24x40xf32>
    %45 = arith.addf %35, %44 : vector<2x24x40xf32>
    %c23_i32_10 = arith.constant 23 : i32
    %46 = vector.broadcast %c23_i32_10 : i32 to vector<24x1xi32>
    %47 = arith.cmpi slt, %3, %46 : vector<24x1xi32>
    %48 = vector.extract_strided_slice %2 {offsets = [0, 1, 0], sizes = [2, 23, 40], strides = [1, 1, 1]} : vector<2x24x40xf32> to vector<2x23x40xf32>
    %49 = vector.extract_strided_slice %2 {offsets = [0, 0, 0], sizes = [2, 1, 40], strides = [1, 1, 1]} : vector<2x24x40xf32> to vector<2x1x40xf32>
    %50 = tpu.concatenate %48, %49 in 1 : vector<2x23x40xf32>, vector<2x1x40xf32> -> vector<2x24x40xf32>
    %cst_11 = arith.constant 0.000000e+00 : f32
    %51 = vector.shape_cast %47 : vector<24x1xi1> to vector<1x24x1xi1>
    %52 = vector.broadcast %51 : vector<1x24x1xi1> to vector<2x24x40xi1>
    %53 = vector.broadcast %cst_11 : f32 to vector<2x24x40xf32>
    %54 = arith.select %52, %50, %53 : vector<2x24x40xi1>, vector<2x24x40xf32>
    %c0_i32_12 = arith.constant 0 : i32
    %55 = vector.broadcast %c0_i32_12 : i32 to vector<24x1xi32>
    %56 = arith.cmpi sgt, %3, %55 : vector<24x1xi32>
    %57 = vector.extract_strided_slice %2 {offsets = [0, 23, 0], sizes = [2, 1, 40], strides = [1, 1, 1]} : vector<2x24x40xf32> to vector<2x1x40xf32>
    %58 = vector.extract_strided_slice %2 {offsets = [0, 0, 0], sizes = [2, 23, 40], strides = [1, 1, 1]} : vector<2x24x40xf32> to vector<2x23x40xf32>
    %59 = tpu.concatenate %57, %58 in 1 : vector<2x1x40xf32>, vector<2x23x40xf32> -> vector<2x24x40xf32>
    %cst_13 = arith.constant 0.000000e+00 : f32
    %60 = vector.shape_cast %56 : vector<24x1xi1> to vector<1x24x1xi1>
    %61 = vector.broadcast %60 : vector<1x24x1xi1> to vector<2x24x40xi1>
    %62 = vector.broadcast %cst_13 : f32 to vector<2x24x40xf32>
    %63 = arith.select %61, %59, %62 : vector<2x24x40xi1>, vector<2x24x40xf32>
    %64 = arith.subf %54, %63 : vector<2x24x40xf32>
    %c0_i32_14 = arith.constant 0 : i32
    %65 = vector.broadcast %c0_i32_14 : i32 to vector<1x40xi32>
    %66 = arith.cmpi sgt, %4, %65 : vector<1x40xi32>
    %67 = vector.extract_strided_slice %64 {offsets = [0, 0, 39], sizes = [2, 24, 1], strides = [1, 1, 1]} : vector<2x24x40xf32> to vector<2x24x1xf32>
    %68 = vector.extract_strided_slice %64 {offsets = [0, 0, 0], sizes = [2, 24, 39], strides = [1, 1, 1]} : vector<2x24x40xf32> to vector<2x24x39xf32>
    %69 = tpu.concatenate %67, %68 in 2 : vector<2x24x1xf32>, vector<2x24x39xf32> -> vector<2x24x40xf32>
    %cst_15 = arith.constant 0.000000e+00 : f32
    %70 = vector.shape_cast %66 : vector<1x40xi1> to vector<1x1x40xi1>
    %71 = vector.broadcast %70 : vector<1x1x40xi1> to vector<2x24x40xi1>
    %72 = vector.broadcast %cst_15 : f32 to vector<2x24x40xf32>
    %73 = arith.select %71, %69, %72 : vector<2x24x40xi1>, vector<2x24x40xf32>
    %cst_16 = arith.constant 2.000000e+00 : f32
    %74 = vector.broadcast %cst_16 : f32 to vector<2x24x40xf32>
    %75 = arith.mulf %74, %64 : vector<2x24x40xf32>
    %76 = arith.addf %73, %75 : vector<2x24x40xf32>
    %c39_i32_17 = arith.constant 39 : i32
    %77 = vector.broadcast %c39_i32_17 : i32 to vector<1x40xi32>
    %78 = arith.cmpi slt, %4, %77 : vector<1x40xi32>
    %79 = vector.extract_strided_slice %64 {offsets = [0, 0, 1], sizes = [2, 24, 39], strides = [1, 1, 1]} : vector<2x24x40xf32> to vector<2x24x39xf32>
    %80 = vector.extract_strided_slice %64 {offsets = [0, 0, 0], sizes = [2, 24, 1], strides = [1, 1, 1]} : vector<2x24x40xf32> to vector<2x24x1xf32>
    %81 = tpu.concatenate %79, %80 in 2 : vector<2x24x39xf32>, vector<2x24x1xf32> -> vector<2x24x40xf32>
    %cst_18 = arith.constant 0.000000e+00 : f32
    %82 = vector.shape_cast %78 : vector<1x40xi1> to vector<1x1x40xi1>
    %83 = vector.broadcast %82 : vector<1x1x40xi1> to vector<2x24x40xi1>
    %84 = vector.broadcast %cst_18 : f32 to vector<2x24x40xf32>
    %85 = arith.select %83, %81, %84 : vector<2x24x40xi1>, vector<2x24x40xf32>
    %86 = arith.addf %76, %85 : vector<2x24x40xf32>
    %87 = math.absf %45 : vector<2x24x40xf32>
    %88 = math.absf %86 : vector<2x24x40xf32>
    %89 = arith.addf %87, %88 : vector<2x24x40xf32>
    %90 = vector.shape_cast %89 : vector<2x24x40xf32> to vector<1x2x24x40xf32>
    %cst_19 = arith.constant dense<0.000000e+00> : vector<1xf32>
    %91 = vector.multi_reduction <add>, %90, %cst_19 [1, 2, 3] : vector<1x2x24x40xf32> to vector<1xf32>
    %92 = vector.shape_cast %91 : vector<1xf32> to vector<1x1x1x1xf32>
    %93 = vector.extract %92[0, 0, 0, 0] : f32 from vector<1x1x1x1xf32>
    %c0_20 = arith.constant 0 : index
    %c0_21 = arith.constant 0 : index
    %94 = memref.load %arg3[%c0_20, %c0_21] : memref<1x1xf32, #tpu.memory_space<smem>>
    memref.store %93, %arg3[%c0_20, %c0_21] : memref<1x1xf32, #tpu.memory_space<smem>>
    return
  }
  func.func @transform_0(%arg0: i32) -> (i32, i32, i32) {
    %c0_i32 = arith.constant 0 : i32
    %c0_i32_0 = arith.constant 0 : i32
    %c0_i32_1 = arith.constant 0 : i32
    return %arg0, %c0_i32, %c0_i32_0 : i32, i32, i32
  }
  func.func @transform_1(%arg0: i32) -> (i32, i32, i32) {
    %c0_i32 = arith.constant 0 : i32
    %c0_i32_0 = arith.constant 0 : i32
    %c0_i32_1 = arith.constant 0 : i32
    return %arg0, %c0_i32, %c0_i32_0 : i32, i32, i32
  }
  func.func @transform_2(%arg0: i32) -> (i32, i32) {
    %c0_i32 = arith.constant 0 : i32
    %c0_i32_0 = arith.constant 0 : i32
    return %arg0, %c0_i32 : i32, i32
  }
}

</mosaic_0001>

<llo_original>
// kernel: tpu_custom_call.1
$region0: #{tpu_custom_call.1}
  #allocation0 [shape = 'u32[]', space=smem, size = 0x4, offset = 0x4, fixed_abs, tag = 'smem constant byte address 0x4 - core index']
  #allocation1 [shape = 'u32[144,128]{1,0:T(1,128)}', space=vmem, size = 0x12000, scoped, tag = 'internal scratch']
  %s0 = inlined_call_operand.hbm [shape: f32[2,24,40], index: 0, kind: input, shape index: {}]
  %s1 = inlined_call_operand.hbm [shape: f32[2,24,40], index: 1, kind: input, shape index: {}]
  %s2 = inlined_call_operand.hbm [shape: f32[1,1], index: 2, kind: output, shape index: {}]
  %s3 = sld [smem:[#allocation0]]
  $region26: #{tpu_custom_call.1} parent=0
    _
  %s5 = ssub.s32 1, %s3
  %s6 = scalar_select 0, %s5, %s3
  $region1: #{tpu_custom_call.1} parent=0
    #allocation2 [shape = 'u8[24576]{0}', space=vmem, size = 0x6000, scoped, tag = 'input window, operand 0, single buffered']
    #allocation3 [shape = 's32[1]{0}', space=sflag, size = 0x4, scoped, tag = 'scoped memory for tpu_custom_call.1']
    #allocation4 [shape = 's32[1]{0}', space=sflag, size = 0x4, scoped, tag = 'scoped memory for tpu_custom_call.1']
    #allocation5 [shape = 'u8[24576]{0}', space=vmem, size = 0x6000, scoped, tag = 'input window, operand 1, single buffered']
    #allocation6 [shape = 's32[1]{0}', space=sflag, size = 0x4, scoped, tag = 'scoped memory for tpu_custom_call.1']
    #allocation7 [shape = 'u8[512]{0}', space=smem, size = 0x200, scoped, tag = 'output window, operand 0, single buffered']
    %7 = vsyncpa [#allocation3], 0
    %8 = vsyncpa [#allocation6], 0
    %9 = vsyncpa [#allocation4], 0
    // Predicated region
    $region2: #{tpu_custom_call.1} parent=1 // pred_check
      _
    $region3: #{tpu_custom_call.1} parent=1 // pred_check_branch
      %11 = sbr.rel (0) target = $region5
    $region4: #{tpu_custom_call.1} parent=1 // pred_region
      %s13 = ssub.s32 768, 768
      %14 = vsyncadd [#allocation3], %s13
      %s15 = sshll.u32 [#allocation2], 4
      %s16 = int_to_ptr.vmem [resolvable:$true] %s15
      %21 = dma.hbm_to_vmem [thread:$0]  %s0, 768, %s16, [#allocation3], 128, 128, 8
    $region5: #{tpu_custom_call.1} parent=1 // pred_fallthru
      _
    // Predicated region
    $region6: #{tpu_custom_call.1} parent=1 // pred_check
      _
    $region7: #{tpu_custom_call.1} parent=1 // pred_check_branch
      %23 = sbr.rel (0) target = $region9
    $region8: #{tpu_custom_call.1} parent=1 // pred_region
      %s25 = ssub.s32 768, 768
      %26 = vsyncadd [#allocation6], %s25
      %s27 = sshll.u32 [#allocation5], 4
      %s28 = int_to_ptr.vmem [resolvable:$true] %s27
      %33 = dma.hbm_to_vmem [thread:$0]  %s1, 768, %s28, [#allocation6], 128, 128, 8
    $region9: #{tpu_custom_call.1} parent=1 // pred_fallthru
      _
    // Predicated region
    $region10: #{tpu_custom_call.1} parent=1 // pred_check
      _
    $region11: #{tpu_custom_call.1} parent=1 // pred_check_branch
      %35 = sbr.rel (0) target = $region13
    $region12: #{tpu_custom_call.1} parent=1 // pred_region
      %36 = dma.done [#allocation3], 768
    $region13: #{tpu_custom_call.1} parent=1 // pred_fallthru
      _
    // Predicated region
    $region14: #{tpu_custom_call.1} parent=1 // pred_check
      _
    $region15: #{tpu_custom_call.1} parent=1 // pred_check_branch
      %38 = sbr.rel (0) target = $region17
    $region16: #{tpu_custom_call.1} parent=1 // pred_region
      %39 = dma.done [#allocation6], 768
    $region17: #{tpu_custom_call.1} parent=1 // pred_fallthru
      _
    %v40 = vld [vmem:[#allocation2] sm:$0xff]
    %v41 = vld [vmem:[#allocation2 + $0x8] sm:$0xff]
    %v42 = vld [vmem:[#allocation2 + $0x10] sm:$0xff]
    %v43 = vld [vmem:[#allocation2 + $0x18] sm:$0xff]
    %v44 = vld [vmem:[#allocation2 + $0x20] sm:$0xff]
    %v45 = vld [vmem:[#allocation2 + $0x28] sm:$0xff]
    %v46 = vld [vmem:[#allocation5] sm:$0xff]
    %v47 = vld [vmem:[#allocation5 + $0x8] sm:$0xff]
    %v48 = vld [vmem:[#allocation5 + $0x10] sm:$0xff]
    %v49 = vld [vmem:[#allocation5 + $0x18] sm:$0xff]
    %v50 = vld [vmem:[#allocation5 + $0x20] sm:$0xff]
    %v51 = vld [vmem:[#allocation5 + $0x28] sm:$0xff]
    %v52 = vsub.f32 %v40, %v46
    %v53 = vsub.f32 %v41, %v47
    %v54 = vsub.f32 %v42, %v48
    %v55 = vsub.f32 %v43, %v49
    %v56 = vsub.f32 %v44, %v50
    %v57 = vsub.f32 %v45, %v51
    %v58 = vlaneseq
    %v59 = vshrl.u32 %v58, 7
    %v60 = vadd.s32 %v59, 8
    %v61 = vadd.s32 %v59, 16
    %v62 = vlaneseq
    %v63 = vand.u32 %v62, 127
    %vm64 = vcmp.lt.s32.totalorder %v63, 39
    %71 = vrot.lane.b32.xlu0 %v52, 127
    %v72 = vpop.permute.xlu0 %71
    %73 = vrot.lane.b32.xlu0 %v53, 127
    %v74 = vpop.permute.xlu0 %73
    %75 = vrot.lane.b32.xlu0 %v54, 127
    %v76 = vpop.permute.xlu0 %75
    %77 = vrot.lane.b32.xlu0 %v55, 127
    %v78 = vpop.permute.xlu0 %77
    %79 = vrot.lane.b32.xlu0 %v56, 127
    %v80 = vpop.permute.xlu0 %79
    %81 = vrot.lane.b32.xlu0 %v57, 127
    %v82 = vpop.permute.xlu0 %81
    %89 = vrot.lane.b32.xlu0 %v52, 39
    %v90 = vpop.permute.xlu0 %89
    %91 = vrot.lane.b32.xlu0 %v53, 39
    %v92 = vpop.permute.xlu0 %91
    %93 = vrot.lane.b32.xlu0 %v54, 39
    %v94 = vpop.permute.xlu0 %93
    %95 = vrot.lane.b32.xlu0 %v55, 39
    %v96 = vpop.permute.xlu0 %95
    %97 = vrot.lane.b32.xlu0 %v56, 39
    %v98 = vpop.permute.xlu0 %97
    %99 = vrot.lane.b32.xlu0 %v57, 39
    %v100 = vpop.permute.xlu0 %99
    %vm107 = vcmask 318464
    %v108 = vsel %vm107, %v72, %v90
    %v109 = vsel %vm107, %v74, %v92
    %v110 = vsel %vm107, %v76, %v94
    %v111 = vsel %vm107, %v78, %v96
    %v112 = vsel %vm107, %v80, %v98
    %v113 = vsel %vm107, %v82, %v100
    %v114 = vsel %vm64, 1, 0
    %vm115 = vcmp.eq.s32.totalorder %v114, 1
    %v116 = vsel %vm115, %v108, 0.0
    %v117 = vsel %vm115, %v109, 0.0
    %v118 = vsel %vm115, %v110, 0.0
    %v119 = vsel %vm115, %v111, 0.0
    %v120 = vsel %vm115, %v112, 0.0
    %v121 = vsel %vm115, %v113, 0.0
    %vm122 = vcmp.gt.s32.totalorder %v63, 0
    %123 = vrot.lane.b32.xlu0 %v52, 89
    %v124 = vpop.permute.xlu0 %123
    %125 = vrot.lane.b32.xlu0 %v53, 89
    %v126 = vpop.permute.xlu0 %125
    %127 = vrot.lane.b32.xlu0 %v54, 89
    %v128 = vpop.permute.xlu0 %127
    %129 = vrot.lane.b32.xlu0 %v55, 89
    %v130 = vpop.permute.xlu0 %129
    %131 = vrot.lane.b32.xlu0 %v56, 89
    %v132 = vpop.permute.xlu0 %131
    %133 = vrot.lane.b32.xlu0 %v57, 89
    %v134 = vpop.permute.xlu0 %133
    %141 = vrot.lane.b32.xlu0 %v52, 1
    %v142 = vpop.permute.xlu0 %141
    %143 = vrot.lane.b32.xlu0 %v53, 1
    %v144 = vpop.permute.xlu0 %143
    %145 = vrot.lane.b32.xlu0 %v54, 1
    %v146 = vpop.permute.xlu0 %145
    %147 = vrot.lane.b32.xlu0 %v55, 1
    %v148 = vpop.permute.xlu0 %147
    %149 = vrot.lane.b32.xlu0 %v56, 1
    %v150 = vpop.permute.xlu0 %149
    %151 = vrot.lane.b32.xlu0 %v57, 1
    %v152 = vpop.permute.xlu0 %151
    %vm159 = vcmask 7168
    %v160 = vsel %vm159, %v124, %v142
    %v161 = vsel %vm159, %v126, %v144
    %v162 = vsel %vm159, %v128, %v146
    %v163 = vsel %vm159, %v130, %v148
    %v164 = vsel %vm159, %v132, %v150
    %v165 = vsel %vm159, %v134, %v152
    %v166 = vsel %vm122, 1, 0
    %vm167 = vcmp.eq.s32.totalorder %v166, 1
    %v168 = vsel %vm167, %v160, 0.0
    %v169 = vsel %vm167, %v161, 0.0
    %v170 = vsel %vm167, %v162, 0.0
    %v171 = vsel %vm167, %v163, 0.0
    %v172 = vsel %vm167, %v164, 0.0
    %v173 = vsel %vm167, %v165, 0.0
    %v174 = vsub.f32 %v116, %v168
    %v175 = vsub.f32 %v117, %v169
    %v176 = vsub.f32 %v118, %v170
    %v177 = vsub.f32 %v119, %v171
    %v178 = vsub.f32 %v120, %v172
    %v179 = vsub.f32 %v121, %v173
    %vm180 = vcmp.gt.s32.totalorder %v59, 0
    %vm181 = vcmp.gt.s32.totalorder %v60, 0
    %vm182 = vcmp.gt.s32.totalorder %v61, 0
    %v185 = vrot.slane %v176, 7
    %v186 = vrot.slane %v179, 7
    %vm193 = vcmask 1040384
    %v194 = vrot.slane %v174, 7
    %v195 = vrot.slane %v175, 7
    %v196 = vsel %vm193, %v194, %v195
    %v197 = vsel %vm193, %v195, %v185
    %v198 = vrot.slane %v177, 7
    %v199 = vrot.slane %v178, 7
    %v200 = vsel %vm193, %v198, %v199
    %v201 = vsel %vm193, %v199, %v186
    %v208 = vsel %vm193, %v185, %v194
    %v209 = vsel %vm193, %v186, %v198
    %v210 = vsel %vm180, 1, 0
    %v211 = vsel %vm181, 1, 0
    %v212 = vsel %vm182, 1, 0
    %vm213 = vcmp.eq.s32.totalorder %v210, 1
    %vm214 = vcmp.eq.s32.totalorder %v211, 1
    %vm215 = vcmp.eq.s32.totalorder %v212, 1
    %v216 = vsel %vm213, %v208, 0.0
    %v217 = vsel %vm214, %v196, 0.0
    %v218 = vsel %vm215, %v197, 0.0
    %v219 = vsel %vm213, %v209, 0.0
    %v220 = vsel %vm214, %v200, 0.0
    %v221 = vsel %vm215, %v201, 0.0
    %v222 = vmul.f32 %v174, 2.0
    %v223 = vmul.f32 %v175, 2.0
    %v224 = vmul.f32 %v176, 2.0
    %v225 = vmul.f32 %v177, 2.0
    %v226 = vmul.f32 %v178, 2.0
    %v227 = vmul.f32 %v179, 2.0
    %v228 = vadd.f32 %v216, %v222
    %v229 = vadd.f32 %v217, %v223
    %v230 = vadd.f32 %v218, %v224
    %v231 = vadd.f32 %v219, %v225
    %v232 = vadd.f32 %v220, %v226
    %v233 = vadd.f32 %v221, %v227
    %vm234 = vcmp.lt.s32.totalorder %v59, 23
    %vm235 = vcmp.lt.s32.totalorder %v60, 23
    %vm236 = vcmp.lt.s32.totalorder %v61, 23
    %vm237 = vcmask 1046528
    %v238 = vrot.slane %v174, 1
    %v239 = vrot.slane %v175, 1
    %v240 = vsel %vm237, %v238, %v239
    %v241 = vrot.slane %v176, 1
    %v242 = vsel %vm237, %v239, %v241
    %v243 = vrot.slane %v177, 1
    %v244 = vrot.slane %v178, 1
    %v245 = vsel %vm237, %v243, %v244
    %v246 = vrot.slane %v179, 1
    %v247 = vsel %vm237, %v244, %v246
    %v256 = vsel %vm237, %v241, %v238
    %v257 = vsel %vm237, %v246, %v243
    %v258 = vsel %vm234, 1, 0
    %v259 = vsel %vm235, 1, 0
    %v260 = vsel %vm236, 1, 0
    %vm261 = vcmp.eq.s32.totalorder %v258, 1
    %vm262 = vcmp.eq.s32.totalorder %v259, 1
    %vm263 = vcmp.eq.s32.totalorder %v260, 1
    %v264 = vsel %vm261, %v240, 0.0
    %v265 = vsel %vm262, %v242, 0.0
    %v266 = vsel %vm263, %v256, 0.0
    %v267 = vsel %vm261, %v245, 0.0
    %v268 = vsel %vm262, %v247, 0.0
    %v269 = vsel %vm263, %v257, 0.0
    %v270 = vadd.f32 %v228, %v264
    %v271 = vadd.f32 %v229, %v265
    %v272 = vadd.f32 %v230, %v266
    %v273 = vadd.f32 %v231, %v267
    %v274 = vadd.f32 %v232, %v268
    %v275 = vadd.f32 %v233, %v269
    %v276 = vrot.slane %v52, 1
    %v277 = vrot.slane %v53, 1
    %v278 = vsel %vm237, %v276, %v277
    %v279 = vrot.slane %v54, 1
    %v280 = vsel %vm237, %v277, %v279
    %v281 = vrot.slane %v55, 1
    %v282 = vrot.slane %v56, 1
    %v283 = vsel %vm237, %v281, %v282
    %v284 = vrot.slane %v57, 1
    %v285 = vsel %vm237, %v282, %v284
    %v294 = vsel %vm237, %v279, %v276
    %v295 = vsel %vm237, %v284, %v281
    %v296 = vsel %vm261, %v278, 0.0
    %v297 = vsel %vm262, %v280, 0.0
    %v298 = vsel %vm263, %v294, 0.0
    %v299 = vsel %vm261, %v283, 0.0
    %v300 = vsel %vm262, %v285, 0.0
    %v301 = vsel %vm263, %v295, 0.0
    %v302 = vrot.slane %v54, 7
    %v303 = vrot.slane %v57, 7
    %v306 = vrot.slane %v52, 7
    %v307 = vrot.slane %v53, 7
    %v308 = vsel %vm193, %v306, %v307
    %v309 = vsel %vm193, %v307, %v302
    %v310 = vrot.slane %v55, 7
    %v311 = vrot.slane %v56, 7
    %v312 = vsel %vm193, %v310, %v311
    %v313 = vsel %vm193, %v311, %v303
    %v320 = vsel %vm193, %v302, %v306
    %v321 = vsel %vm193, %v303, %v310
    %v322 = vsel %vm213, %v320, 0.0
    %v323 = vsel %vm214, %v308, 0.0
    %v324 = vsel %vm215, %v309, 0.0
    %v325 = vsel %vm213, %v321, 0.0
    %v326 = vsel %vm214, %v312, 0.0
    %v327 = vsel %vm215, %v313, 0.0
    %v328 = vsub.f32 %v296, %v322
    %v329 = vsub.f32 %v297, %v323
    %v330 = vsub.f32 %v298, %v324
    %v331 = vsub.f32 %v299, %v325
    %v332 = vsub.f32 %v300, %v326
    %v333 = vsub.f32 %v301, %v327
    %340 = vrot.lane.b32.xlu0 %v328, 89
    %v341 = vpop.permute.xlu0 %340
    %342 = vrot.lane.b32.xlu0 %v329, 89
    %v343 = vpop.permute.xlu0 %342
    %344 = vrot.lane.b32.xlu0 %v330, 89
    %v345 = vpop.permute.xlu0 %344
    %346 = vrot.lane.b32.xlu0 %v331, 89
    %v347 = vpop.permute.xlu0 %346
    %348 = vrot.lane.b32.xlu0 %v332, 89
    %v349 = vpop.permute.xlu0 %348
    %350 = vrot.lane.b32.xlu0 %v333, 89
    %v351 = vpop.permute.xlu0 %350
    %358 = vrot.lane.b32.xlu0 %v328, 1
    %v359 = vpop.permute.xlu0 %358
    %360 = vrot.lane.b32.xlu0 %v329, 1
    %v361 = vpop.permute.xlu0 %360
    %362 = vrot.lane.b32.xlu0 %v330, 1
    %v363 = vpop.permute.xlu0 %362
    %364 = vrot.lane.b32.xlu0 %v331, 1
    %v365 = vpop.permute.xlu0 %364
    %366 = vrot.lane.b32.xlu0 %v332, 1
    %v367 = vpop.permute.xlu0 %366
    %368 = vrot.lane.b32.xlu0 %v333, 1
    %v369 = vpop.permute.xlu0 %368
    %v376 = vsel %vm159, %v341, %v359
    %v377 = vsel %vm159, %v343, %v361
    %v378 = vsel %vm159, %v345, %v363
    %v379 = vsel %vm159, %v347, %v365
    %v380 = vsel %vm159, %v349, %v367
    %v381 = vsel %vm159, %v351, %v369
    %v382 = vsel %vm167, %v376, 0.0
    %v383 = vsel %vm167, %v377, 0.0
    %v384 = vsel %vm167, %v378, 0.0
    %v385 = vsel %vm167, %v379, 0.0
    %v386 = vsel %vm167, %v380, 0.0
    %v387 = vsel %vm167, %v381, 0.0
    %v388 = vmul.f32 %v328, 2.0
    %v389 = vmul.f32 %v329, 2.0
    %v390 = vmul.f32 %v330, 2.0
    %v391 = vmul.f32 %v331, 2.0
    %v392 = vmul.f32 %v332, 2.0
    %v393 = vmul.f32 %v333, 2.0
    %v394 = vadd.f32 %v382, %v388
    %v395 = vadd.f32 %v383, %v389
    %v396 = vadd.f32 %v384, %v390
    %v397 = vadd.f32 %v385, %v391
    %v398 = vadd.f32 %v386, %v392
    %v399 = vadd.f32 %v387, %v393
    %400 = vrot.lane.b32.xlu0 %v328, 127
    %v401 = vpop.permute.xlu0 %400
    %402 = vrot.lane.b32.xlu0 %v329, 127
    %v403 = vpop.permute.xlu0 %402
    %404 = vrot.lane.b32.xlu0 %v330, 127
    %v405 = vpop.permute.xlu0 %404
    %406 = vrot.lane.b32.xlu0 %v331, 127
    %v407 = vpop.permute.xlu0 %406
    %408 = vrot.lane.b32.xlu0 %v332, 127
    %v409 = vpop.permute.xlu0 %408
    %410 = vrot.lane.b32.xlu0 %v333, 127
    %v411 = vpop.permute.xlu0 %410
    %418 = vrot.lane.b32.xlu0 %v328, 39
    %v419 = vpop.permute.xlu0 %418
    %420 = vrot.lane.b32.xlu0 %v329, 39
    %v421 = vpop.permute.xlu0 %420
    %422 = vrot.lane.b32.xlu0 %v330, 39
    %v423 = vpop.permute.xlu0 %422
    %424 = vrot.lane.b32.xlu0 %v331, 39
    %v425 = vpop.permute.xlu0 %424
    %426 = vrot.lane.b32.xlu0 %v332, 39
    %v427 = vpop.permute.xlu0 %426
    %428 = vrot.lane.b32.xlu0 %v333, 39
    %v429 = vpop.permute.xlu0 %428
    %v436 = vsel %vm107, %v401, %v419
    %v437 = vsel %vm107, %v403, %v421
    %v438 = vsel %vm107, %v405, %v423
    %v439 = vsel %vm107, %v407, %v425
    %v440 = vsel %vm107, %v409, %v427
    %v441 = vsel %vm107, %v411, %v429
    %v442 = vsel %vm115, %v436, 0.0
    %v443 = vsel %vm115, %v437, 0.0
    %v444 = vsel %vm115, %v438, 0.0
    %v445 = vsel %vm115, %v439, 0.0
    %v446 = vsel %vm115, %v440, 0.0
    %v447 = vsel %vm115, %v441, 0.0
    %v448 = vadd.f32 %v394, %v442
    %v449 = vadd.f32 %v395, %v443
    %v450 = vadd.f32 %v396, %v444
    %v451 = vadd.f32 %v397, %v445
    %v452 = vadd.f32 %v398, %v446
    %v453 = vadd.f32 %v399, %v447
    %v454 = vand.u32 2147483647, %v270
    %v455 = vand.u32 2147483647, %v271
    %v456 = vand.u32 2147483647, %v272
    %v457 = vand.u32 2147483647, %v273
    %v458 = vand.u32 2147483647, %v274
    %v459 = vand.u32 2147483647, %v275
    %v460 = vand.u32 2147483647, %v448
    %v461 = vand.u32 2147483647, %v449
    %v462 = vand.u32 2147483647, %v450
    %v463 = vand.u32 2147483647, %v451
    %v464 = vand.u32 2147483647, %v452
    %v465 = vand.u32 2147483647, %v453
    %v466 = vadd.f32 %v454, %v460
    %v467 = vadd.f32 %v455, %v461
    %v468 = vadd.f32 %v456, %v462
    %v469 = vadd.f32 %v457, %v463
    %v470 = vadd.f32 %v458, %v464
    %v471 = vadd.f32 %v459, %v465
    %vm472 = vcmask 326656
    %v473 = vsel %vm472, %v466, 0.0
    %v474 = vsel %vm472, %v467, 0.0
    %v475 = vadd.f32 %v473, %v474
    %v476 = vsel %vm472, %v468, 0.0
    %v477 = vadd.f32 %v475, %v476
    %v478 = vsel %vm472, %v469, 0.0
    %v479 = vadd.f32 %v477, %v478
    %v480 = vsel %vm472, %v470, 0.0
    %v481 = vadd.f32 %v479, %v480
    %v482 = vsel %vm472, %v471, 0.0
    %v483 = vadd.f32 %v481, %v482
    %484 = vadd.xlane.f32.xlu0 %v483
    %v485 = vpop.xlane.xlu0 %484
    %v486 = vrot.slane %v485, 4
    %v487 = vadd.f32 %v485, %v486
    %v488 = vrot.slane %v487, 2
    %v489 = vadd.f32 %v487, %v488
    %v490 = vrot.slane %v489, 1
    %v491 = vadd.f32 %v489, %v490
    %s492 = vtos %v491
    %s493 = scalar_lea.smem [#allocation7], 0
    %494 = sst [smem:[%s493]] %s492
    // Predicated region
    $region18: #{tpu_custom_call.1} parent=1 // pred_check
      _
    $region19: #{tpu_custom_call.1} parent=1 // pred_check_branch
      %496 = sbr.rel (0) target = $region21
    $region20: #{tpu_custom_call.1} parent=1 // pred_region
      %s498 = ssub.s32 16, 16
      %499 = vsyncadd [#allocation4], %s498
      %502 = dma.smem_to_hbm [#allocation7], 16, %s2, [#allocation4]
    $region21: #{tpu_custom_call.1} parent=1 // pred_fallthru
      _
    // Predicated region
    $region22: #{tpu_custom_call.1} parent=1 // pred_check
      _
    $region23: #{tpu_custom_call.1} parent=1 // pred_check_branch
      %504 = sbr.rel (0) target = $region25
    $region24: #{tpu_custom_call.1} parent=1 // pred_region
      %505 = dma.done [#allocation4], 16
    $region25: #{tpu_custom_call.1} parent=1 // pred_fallthru
      _
    %506 = sfence
    %507 = vsyncpa [#allocation3], 1
    %508 = vsyncpa [#allocation6], 1
    %509 = vsyncpa [#allocation4], 1

</llo_original>
